<compile_context>
chip_gen: v7x
topology: tpu7x:2x2x1
jax: 0.10.0
libtpu: 0.0.40
codegen_flags: <defaults>
</compile_context>

<pallas_src>
import jax
import jax.numpy as jnp
from jax.experimental import pallas as pl
from jax.experimental.pallas import tpu as pltpu


def _round_up(x: int, m: int) -> int:
    return ((x + m - 1) // m) * m


def fusion_kernel(x1_ref, x2_ref, w1_ref, w2_ref, b1_ref, b2_ref, o_ref):
    # Two MXU matmuls (f32 accumulation) + bias add + elementwise multiply, fused in VMEM.
    y1 = jnp.dot(x1_ref[...], w1_ref[...], preferred_element_type=jnp.float32) + b1_ref[...]
    y2 = jnp.dot(x2_ref[...], w2_ref[...], preferred_element_type=jnp.float32) + b2_ref[...]
    o_ref[...] = (y1 * y2).astype(o_ref.dtype)


def fusion_layer(x1, x2, w1, b1, w2, b2, *, tm=None, tn=None, compute_dtype=None):
    """Forward of FusionLayer: (x1 @ w1.T + b1) * (x2 @ w2.T + b2).

    x1: (B, in1), x2: (B, in2); w1: (out, in1), w2: (out, in2) in torch nn.Linear layout;
    b1, b2: (out,). compute_dtype (e.g. jnp.bfloat16) optionally casts the matmul operands.
    """
    B, in1 = x1.shape
    _, in2 = x2.shape
    out = w1.shape[0]
    out_dtype = x1.dtype

    # Pre-transpose weights to (in, out) so the kernel does plain [B,K]x[K,N] MXU matmuls.
    w1_t = w1.T
    w2_t = w2.T
    b1r = b1.reshape(1, out)
    b2r = b2.reshape(1, out)

    # Lane-dense output: pad out_features to a multiple of 128 (slice back after the call).
    out_p = _round_up(out, 128)
    if out_p != out:
        pad = out_p - out
        w1_t = jnp.pad(w1_t, ((0, 0), (0, pad)))
        w2_t = jnp.pad(w2_t, ((0, 0), (0, pad)))
        b1r = jnp.pad(b1r, ((0, 0), (0, pad)))
        b2r = jnp.pad(b2r, ((0, 0), (0, pad)))

    # Optional low-precision MXU operands (accumulation stays f32 inside the kernel).
    if compute_dtype is not None:
        x1 = x1.astype(compute_dtype)
        x2 = x2.astype(compute_dtype)
        w1_t = w1_t.astype(compute_dtype)
        w2_t = w2_t.astype(compute_dtype)

    # Tile selection: rows in multiples of 8 (f32 sublane) capped at 256; cols in
    # multiples of 128 (lane) capped at 256. At real sizes this yields a >=2-step grid
    # so the BlockSpec pipeline overlaps DMA(i+1) with compute(i) and both v7x TCs work.
    if tm is None:
        tm = B if B <= 256 else 256      # B<=256: block dim equals full array dim (always legal)
    if tn is None:
        tn = min(out_p, 256)

    grid = (pl.cdiv(B, tm), pl.cdiv(out_p, tn))

    itemsize = lambda a: a.size * a.dtype.itemsize
    cost = pl.CostEstimate(
        flops=2 * B * (in1 + in2) * out_p + 3 * B * out_p,
        transcendentals=0,
        bytes_accessed=(itemsize(x1) + itemsize(x2) + itemsize(w1_t) + itemsize(w2_t)
                        + itemsize(b1r) + itemsize(b2r)
                        + B * out_p * jnp.dtype(out_dtype).itemsize),
    )

    y = pl.pallas_call(
        fusion_kernel,
        out_shape=jax.ShapeDtypeStruct((B, out_p), out_dtype),
        grid_spec=pltpu.PrefetchScalarGridSpec(
            num_scalar_prefetch=0,
            grid=grid,
            in_specs=[
                pl.BlockSpec((tm, in1), lambda i, j: (i, 0)),   # x1 row tile
                pl.BlockSpec((tm, in2), lambda i, j: (i, 0)),   # x2 row tile
                pl.BlockSpec((in1, tn), lambda i, j: (0, j)),   # W1^T column tile
                pl.BlockSpec((in2, tn), lambda i, j: (0, j)),   # W2^T column tile
                pl.BlockSpec((1, tn), lambda i, j: (0, j)),     # b1 column tile
                pl.BlockSpec((1, tn), lambda i, j: (0, j)),     # b2 column tile
            ],
            out_specs=pl.BlockSpec((tm, tn), lambda i, j: (i, j)),
        ),
        compiler_params=pltpu.CompilerParams(
            dimension_semantics=("parallel", "parallel"),
        ),
        cost_estimate=cost,
    )(x1, x2, w1_t, w2_t, b1r, b2r)

    if out_p != out:
        y = y[:, :out]
    return y


def init_params(key, in1, in2, out):
    """Deterministic init mimicking nn.Linear's uniform(-1/sqrt(fan_in), 1/sqrt(fan_in))."""
    k1, k2, k3, k4 = jax.random.split(key, 4)
    bound1 = 1.0 / jnp.sqrt(in1)
    bound2 = 1.0 / jnp.sqrt(in2)
    w1 = jax.random.uniform(k1, (out, in1), jnp.float32, -bound1, bound1)  # torch layout (out, in)
    b1 = jax.random.uniform(k2, (out,), jnp.float32, -bound1, bound1)
    w2 = jax.random.uniform(k3, (out, in2), jnp.float32, -bound2, bound2)
    b2 = jax.random.uniform(k4, (out,), jnp.float32, -bound2, bound2)
    return w1, b1, w2, b2


if __name__ == "__main__":
    # Small shapes consistent with the module's forward: input1 (B, in1), input2 (B, in2).
    B, in1, in2, out = 8, 32, 48, 64

    key = jax.random.PRNGKey(0)
    kx1, kx2, kp = jax.random.split(key, 3)
    x1 = jax.random.normal(kx1, (B, in1), jnp.float32)
    x2 = jax.random.normal(kx2, (B, in2), jnp.float32)

    w1, b1, w2, b2 = init_params(kp, in1, in2, out)

    y = fusion_layer(x1, x2, w1, b1, w2, b2)
    y = jax.block_until_ready(y)

    # Pure-JAX reference check.
    ref = (x1 @ w1.T + b1) * (x2 @ w2.T + b2)
    assert y.shape == (B, out)
    assert jnp.allclose(y, ref, atol=1e-5, rtol=1e-5), "mismatch vs reference"

    print("KERNEL_OK")
</pallas_src>

<mosaic_0001>
module attributes {stable_mosaic.version = 11 : i64} {
  func.func @fusion_kernel(%arg0: i32, %arg1: i32, %arg2: memref<8x32xf32, #tpu.memory_space<vmem>>, %arg3: memref<8x48xf32, #tpu.memory_space<vmem>>, %arg4: memref<32x128xf32, #tpu.memory_space<vmem>>, %arg5: memref<48x128xf32, #tpu.memory_space<vmem>>, %arg6: memref<1x128xf32, #tpu.memory_space<vmem>>, %arg7: memref<1x128xf32, #tpu.memory_space<vmem>>, %arg8: memref<8x128xf32, #tpu.memory_space<vmem>>) attributes {dimension_semantics = [#tpu.dimension_semantics<parallel>, #tpu.dimension_semantics<parallel>], iteration_bounds = array<i64: 1, 1>, scalar_prefetch = 0 : i64, scratch_operands = 0 : i64, tpu.core_type = #tpu.core_type<tc>, window_params = [{transform_indices = @transform_0, window_bounds = array<i64: 8, 32>}, {transform_indices = @transform_1, window_bounds = array<i64: 8, 48>}, {transform_indices = @transform_2, window_bounds = array<i64: 32, 128>}, {transform_indices = @transform_3, window_bounds = array<i64: 48, 128>}, {transform_indices = @transform_4, window_bounds = array<i64: 1, 128>}, {transform_indices = @transform_5, window_bounds = array<i64: 1, 128>}, {transform_indices = @transform_6, window_bounds = array<i64: 8, 128>}]} {
    %c0 = arith.constant 0 : index
    %c0_0 = arith.constant 0 : index
    %0 = vector.load %arg2[%c0, %c0_0] : memref<8x32xf32, #tpu.memory_space<vmem>>, vector<8x32xf32>
    %c0_1 = arith.constant 0 : index
    %c0_2 = arith.constant 0 : index
    %1 = vector.load %arg4[%c0_1, %c0_2] : memref<32x128xf32, #tpu.memory_space<vmem>>, vector<32x128xf32>
    %cst = arith.constant dense<0.000000e+00> : vector<8x128xf32>
    %2 = tpu.matmul %0, %1, %cst {dimension_numbers = #tpu.dot_dimension_numbers<[1], [0], [0], [1], [0, 0, 1, 1], [], []>} : vector<8x32xf32>, vector<32x128xf32>, vector<8x128xf32> -> vector<8x128xf32>
    %c0_3 = arith.constant 0 : index
    %c0_4 = arith.constant 0 : index
    %3 = vector.load %arg6[%c0_3, %c0_4] : memref<1x128xf32, #tpu.memory_space<vmem>>, vector<1x128xf32>
    %4 = vector.broadcast %3 : vector<1x128xf32> to vector<8x128xf32>
    %5 = arith.addf %2, %4 : vector<8x128xf32>
    %c0_5 = arith.constant 0 : index
    %c0_6 = arith.constant 0 : index
    %6 = vector.load %arg3[%c0_5, %c0_6] : memref<8x48xf32, #tpu.memory_space<vmem>>, vector<8x48xf32>
    %c0_7 = arith.constant 0 : index
    %c0_8 = arith.constant 0 : index
    %7 = vector.load %arg5[%c0_7, %c0_8] : memref<48x128xf32, #tpu.memory_space<vmem>>, vector<48x128xf32>
    %cst_9 = arith.constant dense<0.000000e+00> : vector<8x128xf32>
    %8 = tpu.matmul %6, %7, %cst_9 {dimension_numbers = #tpu.dot_dimension_numbers<[1], [0], [0], [1], [0, 0, 1, 1], [], []>} : vector<8x48xf32>, vector<48x128xf32>, vector<8x128xf32> -> vector<8x128xf32>
    %c0_10 = arith.constant 0 : index
    %c0_11 = arith.constant 0 : index
    %9 = vector.load %arg7[%c0_10, %c0_11] : memref<1x128xf32, #tpu.memory_space<vmem>>, vector<1x128xf32>
    %10 = vector.broadcast %9 : vector<1x128xf32> to vector<8x128xf32>
    %11 = arith.addf %8, %10 : vector<8x128xf32>
    %12 = arith.mulf %5, %11 : vector<8x128xf32>
    %c0_12 = arith.constant 0 : index
    %c0_13 = arith.constant 0 : index
    %13 = vector.load %arg8[%c0_12, %c0_13] : memref<8x128xf32, #tpu.memory_space<vmem>>, vector<8x128xf32>
    tpu.vector_store %arg8[%c0_12, %c0_13], %12 {strides = array<i32>} : memref<8x128xf32, #tpu.memory_space<vmem>>, vector<8x128xf32>,
    return
  }
  func.func @transform_0(%arg0: i32, %arg1: i32) -> (i32, i32) {
    %c0_i32 = arith.constant 0 : i32
    %c0_i32_0 = arith.constant 0 : i32
    return %arg0, %c0_i32 : i32, i32
  }
  func.func @transform_1(%arg0: i32, %arg1: i32) -> (i32, i32) {
    %c0_i32 = arith.constant 0 : i32
    %c0_i32_0 = arith.constant 0 : i32
    return %arg0, %c0_i32 : i32, i32
  }
  func.func @transform_2(%arg0: i32, %arg1: i32) -> (i32, i32) {
    %c0_i32 = arith.constant 0 : i32
    %c0_i32_0 = arith.constant 0 : i32
    return %c0_i32, %arg1 : i32, i32
  }
  func.func @transform_3(%arg0: i32, %arg1: i32) -> (i32, i32) {
    %c0_i32 = arith.constant 0 : i32
    %c0_i32_0 = arith.constant 0 : i32
    return %c0_i32, %arg1 : i32, i32
  }
  func.func @transform_4(%arg0: i32, %arg1: i32) -> (i32, i32) {
    %c0_i32 = arith.constant 0 : i32
    %c0_i32_0 = arith.constant 0 : i32
    return %c0_i32, %arg1 : i32, i32
  }
  func.func @transform_5(%arg0: i32, %arg1: i32) -> (i32, i32) {
    %c0_i32 = arith.constant 0 : i32
    %c0_i32_0 = arith.constant 0 : i32
    return %c0_i32, %arg1 : i32, i32
  }
  func.func @transform_6(%arg0: i32, %arg1: i32) -> (i32, i32) {
    %c0_i32 = arith.constant 0 : i32
    return %arg0, %arg1 : i32, i32
  }
}

</mosaic_0001>

<llo_original>
// kernel: tpu_custom_call.1
$region0: #{tpu_custom_call.1}
  #allocation0 [shape = 'u32[]', space=smem, size = 0x4, offset = 0x4, fixed_abs, tag = 'smem constant byte address 0x4 - core index']
  #allocation1 [shape = 'u32[144,128]{1,0:T(1,128)}', space=vmem, size = 0x12000, scoped, tag = 'internal scratch']
  %s0 = inlined_call_operand.hbm [shape: f32[8,32], index: 0, kind: input, shape index: {}]
  %s1 = inlined_call_operand.hbm [shape: f32[8,48], index: 1, kind: input, shape index: {}]
  %s2 = inlined_call_operand.hbm [shape: f32[32,128], index: 2, kind: input, shape index: {}]
  %s3 = inlined_call_operand.hbm [shape: f32[48,128], index: 3, kind: input, shape index: {}]
  %s4 = inlined_call_operand.vmem [shape: f32[1,128], index: 4, kind: input, shape index: {}]
  %s5 = inlined_call_operand.vmem [shape: f32[1,128], index: 5, kind: input, shape index: {}]
  %s6 = inlined_call_operand.hbm [shape: f32[8,128], index: 6, kind: output, shape index: {}]
  %s7 = sld [smem:[#allocation0]]
  $region50: #{tpu_custom_call.1} parent=0
    _
  %s9 = ssub.s32 1, %s7
  %s10 = scalar_select 0, %s9, %s7
  $region1: #{tpu_custom_call.1} parent=0
    #allocation2 [shape = 'u8[4096]{0}', space=vmem, size = 0x1000, scoped, tag = 'input window, operand 0, single buffered']
    #allocation3 [shape = 's32[1]{0}', space=sflag, size = 0x4, scoped, tag = 'scoped memory for tpu_custom_call.1']
    #allocation4 [shape = 's32[1]{0}', space=sflag, size = 0x4, scoped, tag = 'scoped memory for tpu_custom_call.1']
    #allocation5 [shape = 'u8[4096]{0}', space=vmem, size = 0x1000, scoped, tag = 'input window, operand 1, single buffered']
    #allocation6 [shape = 's32[1]{0}', space=sflag, size = 0x4, scoped, tag = 'scoped memory for tpu_custom_call.1']
    #allocation7 [shape = 'u8[16384]{0}', space=vmem, size = 0x4000, scoped, tag = 'input window, operand 2, single buffered']
    #allocation8 [shape = 'u8[24576]{0}', space=vmem, size = 0x6000, scoped, tag = 'input window, operand 3, single buffered']
    #allocation9 [shape = 's32[1]{0}', space=sflag, size = 0x4, scoped, tag = 'scoped memory for tpu_custom_call.1']
    #allocation10 [shape = 'u8[4096]{0}', space=vmem, size = 0x1000, scoped, tag = 'output window, operand 0, single buffered']
    %11 = vsyncpa [#allocation3], 0
    %12 = vsyncpa [#allocation6], 0
    %13 = vsyncpa [#allocation9], 0
    %14 = vsyncpa [#allocation4], 0
    // Predicated region
    $region2: #{tpu_custom_call.1} parent=1 // pred_check
      _
    $region3: #{tpu_custom_call.1} parent=1 // pred_check_branch
      %16 = sbr.rel (0) target = $region5
    $region4: #{tpu_custom_call.1} parent=1 // pred_region
      %s18 = ssub.s32 128, 128
      %19 = vsyncadd [#allocation3], %s18
      %s21 = sshll.u32 [#allocation2], 4
      %s22 = int_to_ptr.vmem [resolvable:$true] %s21
      %24 = dma.hbm_to_vmem [thread:$0]  %s0, 128, %s22, [#allocation3]
    $region5: #{tpu_custom_call.1} parent=1 // pred_fallthru
      _
    // Predicated region
    $region6: #{tpu_custom_call.1} parent=1 // pred_check
      _
    $region7: #{tpu_custom_call.1} parent=1 // pred_check_branch
      %26 = sbr.rel (0) target = $region9
    $region8: #{tpu_custom_call.1} parent=1 // pred_region
      %s28 = ssub.s32 128, 128
      %29 = vsyncadd [#allocation6], %s28
      %s31 = sshll.u32 [#allocation5], 4
      %s32 = int_to_ptr.vmem [resolvable:$true] %s31
      %34 = dma.hbm_to_vmem [thread:$0]  %s1, 128, %s32, [#allocation6]
    $region9: #{tpu_custom_call.1} parent=1 // pred_fallthru
      _
    // Predicated region
    $region10: #{tpu_custom_call.1} parent=1 // pred_check
      _
    $region11: #{tpu_custom_call.1} parent=1 // pred_check_branch
      %36 = sbr.rel (0) target = $region13
    $region12: #{tpu_custom_call.1} parent=1 // pred_region
      %s38 = ssub.s32 512, 512
      %39 = vsyncadd [#allocation6], %s38
      %s40 = sshll.u32 [#allocation7], 4
      %s41 = int_to_ptr.vmem [resolvable:$true] %s40
      %46 = dma.hbm_to_vmem [thread:$0]  %s2, 512, %s41, [#allocation6], 128, 128, 8
    $region13: #{tpu_custom_call.1} parent=1 // pred_fallthru
      _
    // Predicated region
    $region14: #{tpu_custom_call.1} parent=1 // pred_check
      _
    $region15: #{tpu_custom_call.1} parent=1 // pred_check_branch
      %48 = sbr.rel (0) target = $region17
    $region16: #{tpu_custom_call.1} parent=1 // pred_region
      %s50 = ssub.s32 768, 768
      %51 = vsyncadd [#allocation9], %s50
      %s52 = sshll.u32 [#allocation8], 4
      %s53 = int_to_ptr.vmem [resolvable:$true] %s52
      %58 = dma.hbm_to_vmem [thread:$0]  %s3, 768, %s53, [#allocation9], 128, 128, 8
    $region17: #{tpu_custom_call.1} parent=1 // pred_fallthru
      _
    // Predicated region
    $region18: #{tpu_custom_call.1} parent=1 // pred_check
      _
    $region19: #{tpu_custom_call.1} parent=1 // pred_check_branch
      %60 = sbr.rel (0) target = $region21
    $region20: #{tpu_custom_call.1} parent=1 // pred_region
      _
    $region21: #{tpu_custom_call.1} parent=1 // pred_fallthru
      _
    // Predicated region
    $region22: #{tpu_custom_call.1} parent=1 // pred_check
      _
    $region23: #{tpu_custom_call.1} parent=1 // pred_check_branch
      %62 = sbr.rel (0) target = $region25
    $region24: #{tpu_custom_call.1} parent=1 // pred_region
      _
    $region25: #{tpu_custom_call.1} parent=1 // pred_fallthru
      _
    // Predicated region
    $region26: #{tpu_custom_call.1} parent=1 // pred_check
      _
    $region27: #{tpu_custom_call.1} parent=1 // pred_check_branch
      %64 = sbr.rel (0) target = $region29
    $region28: #{tpu_custom_call.1} parent=1 // pred_region
      %65 = dma.done [#allocation3], 128
    $region29: #{tpu_custom_call.1} parent=1 // pred_fallthru
      _
    // Predicated region
    $region30: #{tpu_custom_call.1} parent=1 // pred_check
      _
    $region31: #{tpu_custom_call.1} parent=1 // pred_check_branch
      %67 = sbr.rel (0) target = $region33
    $region32: #{tpu_custom_call.1} parent=1 // pred_region
      %68 = dma.done [#allocation6], 128
    $region33: #{tpu_custom_call.1} parent=1 // pred_fallthru
      _
    // Predicated region
    $region34: #{tpu_custom_call.1} parent=1 // pred_check
      _
    $region35: #{tpu_custom_call.1} parent=1 // pred_check_branch
      %70 = sbr.rel (0) target = $region37
    $region36: #{tpu_custom_call.1} parent=1 // pred_region
      %71 = dma.done [#allocation6], 512
    $region37: #{tpu_custom_call.1} parent=1 // pred_fallthru
      _
    // Predicated region
    $region38: #{tpu_custom_call.1} parent=1 // pred_check
      _
    $region39: #{tpu_custom_call.1} parent=1 // pred_check_branch
      %73 = sbr.rel (0) target = $region41
    $region40: #{tpu_custom_call.1} parent=1 // pred_region
      %74 = dma.done [#allocation9], 768
    $region41: #{tpu_custom_call.1} parent=1 // pred_fallthru
      _
    %v75 = vld [vmem:[#allocation2] sm:$0xff]
    %v76 = vld [vmem:[#allocation7] sm:$0xff]
    %v77 = vld [vmem:[#allocation7 + $0x8] sm:$0xff]
    %v78 = vld [vmem:[#allocation7 + $0x10] sm:$0xff]
    %v79 = vld [vmem:[#allocation7 + $0x18] sm:$0xff]
    %v80 = vld [vmem:[%s4] sm:$0x1]
    %v82 = vlaneseq
    %v83 = vshrl.u32 %v82, 7
    %v84 = vsub.s32 0, %v83
    %v85 = vrot.slane %v80, %v84
    %vm87 = vcmask 261120
    %v89 = vsel %vm87, %v75, 0
    %91 = vmatprep.subr.mxu0 0.0
    %92 = vmatpush1.msra.mxu0 %v76
    %93 = vmatprep.subr.mxu0 0.0
    %94 = vmatpush1.msra.mxu0 %v77
    %95 = vmatprep.subr.mxu0 0.0
    %96 = vmatpush1.msra.mxu0 %v78
    %97 = vmatprep.subr.mxu0 0.0
    %98 = vmatpush1.msra.mxu0 %v79
    %99 = vmatprep.subr.mxu0 0.0
    %100 = vmatpush1.msra.mxu0 0.0
    %101 = vmatprep.subr.mxu0 0.0
    %102 = vmatpush1.msra.mxu0 0.0
    %103 = vmatprep.subr.mxu0 0.0
    %104 = vmatpush1.msra.mxu0 0.0
    %105 = vmatprep.subr.mxu0 0.0
    %106 = vmatpush1.msra.mxu0 0.0
    %107 = vmatprep.subr.mxu0 0.0
    %108 = vmatpush1.msra.mxu0 0.0
    %109 = vmatprep.subr.mxu0 0.0
    %110 = vmatpush1.msra.mxu0 0.0
    %111 = vmatprep.subr.mxu0 0.0
    %112 = vmatpush1.msra.mxu0 0.0
    %113 = vmatprep.subr.mxu0 0.0
    %114 = vmatpush1.msra.mxu0 0.0
    %115 = vmatprep.subr.mxu0 0.0
    %116 = vmatpush1.msra.mxu0 0.0
    %117 = vmatprep.subr.mxu0 0.0
    %118 = vmatpush1.msra.mxu0 0.0
    %119 = vmatprep.subr.mxu0 0.0
    %120 = vmatpush1.msra.mxu0 0.0
    %121 = vmatprep.subr.mxu0 0.0
    %122 = vmatpush1.msra.mxu0 0.0
    %123 = vmatprep.subr.mxu0 0.0
    %124 = vmatpush1.msra.mxu0 0.0
    %125 = vmatprep.subr.mxu0 0.0
    %126 = vmatpush1.msra.mxu0 0.0
    %127 = vmatprep.subr.mxu0 0.0
    %128 = vmatpush1.msra.mxu0 0.0
    %129 = vmatprep.subr.mxu0 0.0
    %130 = vmatpush1.msra.mxu0 0.0
    %131 = vmatprep.subr.mxu0 0.0
    %132 = vmatpush1.msra.mxu0 0.0
    %133 = vmatprep.subr.mxu0 0.0
    %134 = vmatpush1.msra.mxu0 0.0
    %135 = vmatprep.subr.mxu0 0.0
    %136 = vmatpush1.msra.mxu0 0.0
    %137 = vmatprep.subr.mxu0 0.0
    %138 = vmatpush1.msra.mxu0 0.0
    %139 = vmatprep.subr.mxu0 0.0
    %140 = vmatpush1.msra.mxu0 0.0
    %141 = vmatprep.subr.mxu0 0.0
    %142 = vmatpush1.msra.mxu0 0.0
    %143 = vmatprep.subr.mxu0 0.0
    %144 = vmatpush1.msra.mxu0 0.0
    %145 = vmatprep.subr.mxu0 0.0
    %146 = vmatpush1.msra.mxu0 0.0
    %147 = vmatprep.subr.mxu0 0.0
    %148 = vmatpush1.msra.mxu0 0.0
    %149 = vmatprep.subr.mxu0 0.0
    %150 = vmatpush1.msra.mxu0 0.0
    %151 = vmatprep.subr.mxu0 0.0
    %152 = vmatpush1.msra.mxu0 0.0
    %153 = vmatprep.subr.mxu0 0.0
    %154 = vmatpush1.msra.mxu0 0.0
    %155 = vmatprep.mubr.f32.mxu0 0.0
    %156 = vmatmul.mubr.f32.gmra.mrb[0].mxu0 %v89
    %v157 = vpop.f32.mrb[0].mxu0
    %v158 = vadd.f32 %v85, %v157
    %v159 = vpop.f32.mrb[0].mxu0
    %160 = vdwg.mxu0
    %v161 = vld [vmem:[#allocation5] sm:$0xff]
    %v162 = vld [vmem:[#allocation8] sm:$0xff]
    %v163 = vld [vmem:[#allocation8 + $0x8] sm:$0xff]
    %v164 = vld [vmem:[#allocation8 + $0x10] sm:$0xff]
    %v165 = vld [vmem:[#allocation8 + $0x18] sm:$0xff]
    %v166 = vld [vmem:[#allocation8 + $0x20] sm:$0xff]
    %v167 = vld [vmem:[#allocation8 + $0x28] sm:$0xff]
    %v168 = vld [vmem:[%s5] sm:$0x1]
    %v170 = vlaneseq
    %v171 = vshrl.u32 %v170, 7
    %v172 = vsub.s32 0, %v171
    %v173 = vrot.slane %v168, %v172
    %vm175 = vcmask 392192
    %v177 = vsel %vm175, %v161, 0
    %179 = vmatprep.subr.mxu0 0.0
    %180 = vmatpush1.msra.mxu0 %v162
    %181 = vmatprep.subr.mxu0 0.0
    %182 = vmatpush1.msra.mxu0 %v163
    %183 = vmatprep.subr.mxu0 0.0
    %184 = vmatpush1.msra.mxu0 %v164
    %185 = vmatprep.subr.mxu0 0.0
    %186 = vmatpush1.msra.mxu0 %v165
    %187 = vmatprep.subr.mxu0 0.0
    %188 = vmatpush1.msra.mxu0 %v166
    %189 = vmatprep.subr.mxu0 0.0
    %190 = vmatpush1.msra.mxu0 %v167
    %191 = vmatprep.subr.mxu0 0.0
    %192 = vmatpush1.msra.mxu0 0.0
    %193 = vmatprep.subr.mxu0 0.0
    %194 = vmatpush1.msra.mxu0 0.0
    %195 = vmatprep.subr.mxu0 0.0
    %196 = vmatpush1.msra.mxu0 0.0
    %197 = vmatprep.subr.mxu0 0.0
    %198 = vmatpush1.msra.mxu0 0.0
    %199 = vmatprep.subr.mxu0 0.0
    %200 = vmatpush1.msra.mxu0 0.0
    %201 = vmatprep.subr.mxu0 0.0
    %202 = vmatpush1.msra.mxu0 0.0
    %203 = vmatprep.subr.mxu0 0.0
    %204 = vmatpush1.msra.mxu0 0.0
    %205 = vmatprep.subr.mxu0 0.0
    %206 = vmatpush1.msra.mxu0 0.0
    %207 = vmatprep.subr.mxu0 0.0
    %208 = vmatpush1.msra.mxu0 0.0
    %209 = vmatprep.subr.mxu0 0.0
    %210 = vmatpush1.msra.mxu0 0.0
    %211 = vmatprep.subr.mxu0 0.0
    %212 = vmatpush1.msra.mxu0 0.0
    %213 = vmatprep.subr.mxu0 0.0
    %214 = vmatpush1.msra.mxu0 0.0
    %215 = vmatprep.subr.mxu0 0.0
    %216 = vmatpush1.msra.mxu0 0.0
    %217 = vmatprep.subr.mxu0 0.0
    %218 = vmatpush1.msra.mxu0 0.0
    %219 = vmatprep.subr.mxu0 0.0
    %220 = vmatpush1.msra.mxu0 0.0
    %221 = vmatprep.subr.mxu0 0.0
    %222 = vmatpush1.msra.mxu0 0.0
    %223 = vmatprep.subr.mxu0 0.0
    %224 = vmatpush1.msra.mxu0 0.0
    %225 = vmatprep.subr.mxu0 0.0
    %226 = vmatpush1.msra.mxu0 0.0
    %227 = vmatprep.subr.mxu0 0.0
    %228 = vmatpush1.msra.mxu0 0.0
    %229 = vmatprep.subr.mxu0 0.0
    %230 = vmatpush1.msra.mxu0 0.0
    %231 = vmatprep.subr.mxu0 0.0
    %232 = vmatpush1.msra.mxu0 0.0
    %233 = vmatprep.subr.mxu0 0.0
    %234 = vmatpush1.msra.mxu0 0.0
    %235 = vmatprep.subr.mxu0 0.0
    %236 = vmatpush1.msra.mxu0 0.0
    %237 = vmatprep.subr.mxu0 0.0
    %238 = vmatpush1.msra.mxu0 0.0
    %239 = vmatprep.subr.mxu0 0.0
    %240 = vmatpush1.msra.mxu0 0.0
    %241 = vmatprep.subr.mxu0 0.0
    %242 = vmatpush1.msra.mxu0 0.0
    %243 = vmatprep.mubr.f32.mxu0 0.0
    %244 = vmatmul.mubr.f32.gmra.mrb[0].mxu0 %v177
    %v245 = vpop.f32.mrb[0].mxu0
    %v246 = vadd.f32 %v173, %v245
    %v247 = vpop.f32.mrb[0].mxu0
    %248 = vdwg.mxu0
    %v249 = vmul.f32 %v158, %v246
    %250 = vst [vmem:[#allocation10] sm:$0xff] %v249
    // Predicated region
    $region42: #{tpu_custom_call.1} parent=1 // pred_check
      _
    $region43: #{tpu_custom_call.1} parent=1 // pred_check_branch
      %252 = sbr.rel (0) target = $region45
    $region44: #{tpu_custom_call.1} parent=1 // pred_region
      %s254 = ssub.s32 128, 128
      %255 = vsyncadd [#allocation4], %s254
      %s257 = sshll.u32 [#allocation10], 4
      %s258 = int_to_ptr.vmem [resolvable:$true] %s257
      %260 = dma.vmem_to_hbm [thread:$0]  %s258, 128, %s6, [#allocation4]
    $region45: #{tpu_custom_call.1} parent=1 // pred_fallthru
      _
    // Predicated region
    $region46: #{tpu_custom_call.1} parent=1 // pred_check
      _
    $region47: #{tpu_custom_call.1} parent=1 // pred_check_branch
      %262 = sbr.rel (0) target = $region49
    $region48: #{tpu_custom_call.1} parent=1 // pred_region
      %263 = dma.done [#allocation4], 128
    $region49: #{tpu_custom_call.1} parent=1 // pred_fallthru
      _
    %264 = vsyncpa [#allocation3], 1
    %265 = vsyncpa [#allocation6], 1
    %266 = vsyncpa [#allocation9], 1
    %267 = vsyncpa [#allocation4], 1

</llo_original>
